<compile_context>
chip_gen: v7x
topology: tpu7x:2x2x1
jax: 0.10.0
libtpu: 0.0.40
codegen_flags: <defaults>
</compile_context>

<pallas_src>
import functools

import jax
import jax.numpy as jnp
from jax import lax
from jax.experimental import pallas as pl
from jax.experimental.pallas import tpu as pltpu

EPS = 1e-5                      # PyTorch GroupNorm default eps
VMEM_LIMIT = 48 * 1024 * 1024   # explicit scoped-VMEM budget (fits v7x's 64 MiB physical)


# ------------------------------ helpers ------------------------------------ #

def _choose_td(D, HW, C, Cout, budget=20 * 1024 * 1024):
    """Largest depth-slab TD (divisor of D) whose working set fits the budget,
    preferring TD*HW a multiple of 256 (MXU-native N on v6e/v7x)."""
    feasible = []
    for td in range(1, D + 1):
        if D % td:
            continue
        slab = (td + 2) * C * HW * 4                       # f32 normalized halo'd slab
        col = 9 * C * td * HW * 2                          # bf16 per-kd column block
        acc = 2 * Cout * td * HW * 4                       # f32 accumulator + SiLU temp
        io = 2 * ((C + Cout) * td * HW * 4 + 2 * C * HW * 4)   # double-buffered IO
        if slab + col + acc + io <= budget:
            feasible.append(td)
    if not feasible:
        return 1
    pref = [t for t in feasible if (t * HW) % 256 == 0]
    return max(pref) if pref else max(feasible)


def _tap_masks(H, W, TD):
    # 8 hoisted (dh, dw) border-validity masks over the TD*HW output lanes
    # ((0, 0) needs none); built from 4 base compares, reused by all 27 taps.
    HW = H * W
    lane = lax.broadcasted_iota(jnp.int32, (1, TD * HW), 1)
    hw = lane % HW
    hh = hw // W
    ww = hw % W
    ch = {-1: hh >= 1, 0: None, 1: hh < H - 1}
    cw = {-1: ww >= 1, 0: None, 1: ww < W - 1}
    masks = {}
    for dh in (-1, 0, 1):
        for dw in (-1, 0, 1):
            parts = [c for c in (ch[dh], cw[dw]) if c is not None]
            if not parts:
                continue
            m = parts[0]
            for p in parts[1:]:
                m = m & p
            masks[(dh, dw)] = m
    return masks


def _conv27_slab(slab, w_ref, masks, H, W, TD):
    """3x3x3 'SAME' cross-correlation for one TD-plane slab.

    slab: (C, (TD+2)*HW) f32 normalized activations; slab planes 0 and TD+1 are the depth
    halos (already zeroed at the grid edges).  w_ref: (3, Cout, 9*C) bf16 with rows ordered
    (kh, kw, ci).  Each tap is a pltpu.roll of the slab (wrap-around only lands on masked
    positions) + hoisted (dh, dw) mask; the 9 taps of each kd form a (9C, TD*HW) bf16
    column block -> 3 MXU matmuls accumulated in f32.  Returns (Cout, TD*HW) f32.
    """
    HW = H * W
    TDHW = TD * HW
    SLABW = slab.shape[1]
    acc = None
    for kd in range(3):
        cols = []
        for kh in range(3):
            dh = kh - 1
            for kw in range(3):
                dw = kw - 1
                amt = kd * HW + dh * W + dw          # col[q] = slab[q + amt]
                s = (-amt) % SLABW
                t = slab if s == 0 else pltpu.roll(slab, s, axis=1)
                t = t[:, :TDHW]
                m = masks.get((dh, dw))
                if m is not None:
                    t = jnp.where(m, t, 0.0)
                cols.append(t.astype(jnp.bfloat16))
        col = jnp.concatenate(cols, axis=0)                          # (9C, TD*HW) bf16
        part = jnp.dot(w_ref[kd], col, preferred_element_type=jnp.float32)
        acc = part if acc is None else acc + part
    return acc


# ----------------------------- Pallas kernels ------------------------------ #

def _gn_stats_kernel(x_ref, sum_ref, sq_ref):
    # One TD-plane slab -> per-channel partial (sum, sumsq); reduced over slabs in glue.
    x = x_ref[0].astype(jnp.float32)                                 # (C, TD*HW)
    sum_ref[0, 0] = jnp.sum(x, axis=1, keepdims=True)
    sq_ref[0, 0] = jnp.sum(x * x, axis=1, keepdims=True)


def _norm_slab(xp_ref, xm_ref, xn_ref, sc_ref, sh_ref):
    # GroupNorm-apply (f32) for [prev halo | TD main planes | next halo]; halo planes that
    # fall outside the depth range are zeroed (== 'SAME' zero padding of the normed tensor).
    d = pl.program_id(1)
    ns = pl.num_programs(1)
    sc = sc_ref[0]                                                   # (C, 1)
    sh = sh_ref[0]
    pvalid = (d > 0).astype(jnp.float32)
    nvalid = (d < ns - 1).astype(jnp.float32)
    prev = (xp_ref[0].astype(jnp.float32) * sc + sh) * pvalid        # (C, HW)
    mid = xm_ref[0].astype(jnp.float32) * sc + sh                    # (C, TD*HW)
    nxt = (xn_ref[0].astype(jnp.float32) * sc + sh) * nvalid         # (C, HW)
    return jnp.concatenate([prev, mid, nxt], axis=1)                 # (C, (TD+2)*HW)


def _convblock_kernel(xp_ref, xm_ref, xn_ref, sc_ref, sh_ref, w_ref,
                      o_ref, ps_ref, pq_ref, *, H, W, TD):
    # Fused GroupNorm-apply -> SparseConv3d(3, bias=False) -> SiLU for one depth slab,
    # plus per-slab partial sum/sumsq of the output (GN2 statistics fused).
    slab = _norm_slab(xp_ref, xm_ref, xn_ref, sc_ref, sh_ref)
    masks = _tap_masks(H, W, TD)
    pre = _conv27_slab(slab, w_ref, masks, H, W, TD)                 # (Cout, TD*HW) f32
    h = pre * jax.nn.sigmoid(pre)                                    # SiLU (sigmoid -> EUP)
    o_ref[0] = h.astype(o_ref.dtype)
    ps_ref[0, 0] = jnp.sum(h, axis=1, keepdims=True)
    pq_ref[0, 0] = jnp.sum(h * h, axis=1, keepdims=True)


def _convblock_skip_kernel(xp_ref, xm_ref, xn_ref, sc_ref, sh_ref, w_ref,
                           x0_ref, ws_ref, bs_ref, o_ref, *, H, W, TD):
    # Second ConvBlock fused with the 1x1 skip conv (bias=True) and residual add.
    slab = _norm_slab(xp_ref, xm_ref, xn_ref, sc_ref, sh_ref)
    masks = _tap_masks(H, W, TD)
    pre = _conv27_slab(slab, w_ref, masks, H, W, TD)
    h = pre * jax.nn.sigmoid(pre)
    skip = jnp.dot(ws_ref[...], x0_ref[0].astype(jnp.bfloat16),
                   preferred_element_type=jnp.float32) + bs_ref[...]
    o_ref[0] = h + skip


# ------------------------------ pallas_call wrappers ------------------------ #

def _slab_specs(C, HW, D, TD):
    # TD-plane main slab + single-plane depth halos of the same (N, C, D*HW) array;
    # the clamped edge fetches are zeroed inside the kernel via the depth-validity scalars.
    main = pl.BlockSpec((1, C, TD * HW), lambda n, d: (n, 0, d))
    prev = pl.BlockSpec((1, C, HW),
                        lambda n, d: (n, 0, jnp.maximum(d * TD - 1, 0)))
    nxt = pl.BlockSpec((1, C, HW),
                       lambda n, d: (n, 0, jnp.minimum((d + 1) * TD, D - 1)))
    return prev, main, nxt


def gn_stats(x, TD, HW):
    # x: (N, C, D*HW) -> per-slab partial (sum, sumsq), each (N, S, C, 1).
    N, C, L = x.shape
    S = L // (TD * HW)
    return pl.pallas_call(
        _gn_stats_kernel,
        out_shape=(jax.ShapeDtypeStruct((N, S, C, 1), jnp.float32),
                   jax.ShapeDtypeStruct((N, S, C, 1), jnp.float32)),
        grid=(N, S),
        in_specs=[pl.BlockSpec((1, C, TD * HW), lambda n, d: (n, 0, d))],
        out_specs=(pl.BlockSpec((1, 1, C, 1), lambda n, d: (n, d, 0, 0)),
                   pl.BlockSpec((1, 1, C, 1), lambda n, d: (n, d, 0, 0))),
        compiler_params=pltpu.CompilerParams(
            dimension_semantics=("parallel", "parallel"),
            vmem_limit_bytes=VMEM_LIMIT),
    )(x)


def conv_block(x, scale, shift, w_pack, H, W, TD):
    # x: (N, C, D*HW); scale/shift: (N, C, 1); w_pack: (3, Cout, 9*C) bf16.
    # Returns (h bf16 (N, Cout, D*HW), per-slab sum/sumsq of h (N, S, Cout, 1)).
    N, C, L = x.shape
    HW = H * W
    D = L // HW
    S = D // TD
    Cout = w_pack.shape[1]
    prev, main, nxt = _slab_specs(C, HW, D, TD)
    scal = pl.BlockSpec((1, C, 1), lambda n, d: (n, 0, 0))
    return pl.pallas_call(
        functools.partial(_convblock_kernel, H=H, W=W, TD=TD),
        out_shape=(jax.ShapeDtypeStruct((N, Cout, L), jnp.bfloat16),
                   jax.ShapeDtypeStruct((N, S, Cout, 1), jnp.float32),
                   jax.ShapeDtypeStruct((N, S, Cout, 1), jnp.float32)),
        grid=(N, S),
        in_specs=[prev, main, nxt, scal, scal,
                  pl.BlockSpec((3, Cout, 9 * C), lambda n, d: (0, 0, 0))],
        out_specs=(pl.BlockSpec((1, Cout, TD * HW), lambda n, d: (n, 0, d)),
                   pl.BlockSpec((1, 1, Cout, 1), lambda n, d: (n, d, 0, 0)),
                   pl.BlockSpec((1, 1, Cout, 1), lambda n, d: (n, d, 0, 0))),
        compiler_params=pltpu.CompilerParams(
            dimension_semantics=("parallel", "parallel"),
            vmem_limit_bytes=VMEM_LIMIT),
    )(x, x, x, scale, shift, w_pack)


def conv_block_skip(x, scale, shift, w_pack, x0, ws_t, bs, H, W, TD):
    # Second ConvBlock fused with the 1x1 skip conv on x0 (the block input).
    N, C, L = x.shape
    HW = H * W
    D = L // HW
    S = D // TD
    Cout = w_pack.shape[1]
    Cin0 = x0.shape[1]
    prev, main, nxt = _slab_specs(C, HW, D, TD)
    scal = pl.BlockSpec((1, C, 1), lambda n, d: (n, 0, 0))
    return pl.pallas_call(
        functools.partial(_convblock_skip_kernel, H=H, W=W, TD=TD),
        out_shape=jax.ShapeDtypeStruct((N, Cout, L), jnp.float32),
        grid=(N, S),
        in_specs=[prev, main, nxt, scal, scal,
                  pl.BlockSpec((3, Cout, 9 * C), lambda n, d: (0, 0, 0)),
                  pl.BlockSpec((1, Cin0, TD * HW), lambda n, d: (n, 0, d)),
                  pl.BlockSpec((Cout, Cin0), lambda n, d: (0, 0)),
                  pl.BlockSpec((Cout, 1), lambda n, d: (0, 0))],
        out_specs=pl.BlockSpec((1, Cout, TD * HW), lambda n, d: (n, 0, d)),
        compiler_params=pltpu.CompilerParams(
            dimension_semantics=("parallel", "parallel"),
            vmem_limit_bytes=VMEM_LIMIT),
    )(x, x, x, scale, shift, w_pack, x0, ws_t, bs)


# ------------------------------ JAX glue ----------------------------------- #

def gn_scale_shift(psum, psq, gamma, beta, groups, count):
    # psum/psq: (N, S, C, 1) per-slab partial sums -> per-channel GroupNorm
    # (scale, shift), each (N, C, 1), applied inside the conv kernels.
    ssum = psum.sum(axis=1)[..., 0]                  # (N, C)
    ssq = psq.sum(axis=1)[..., 0]
    N, C = ssum.shape
    gs = C // groups
    cnt = float(count * gs)
    gsum = ssum.reshape(N, groups, gs).sum(axis=2)
    gsq = ssq.reshape(N, groups, gs).sum(axis=2)
    mean = gsum / cnt
    # TODO(synk): E[x^2]-E[x]^2 can cancel for far-from-zero-mean activations; switch to
    # a pivoted / two-pass scheme if that regime matters in production.
    var = jnp.maximum(gsq / cnt - mean * mean, 0.0)
    inv = lax.rsqrt(var + EPS)
    mean_c = jnp.repeat(mean, gs, axis=1)            # (N, C)
    inv_c = jnp.repeat(inv, gs, axis=1)
    scale = gamma[None, :] * inv_c
    shift = beta[None, :] - mean_c * scale
    return scale[..., None], shift[..., None]


def pack_weights(w):
    # (3, 3, 3, Cin, Cout) -> (kd, Cout, (kh, kw, ci)) bf16 for the per-kd MXU matmuls.
    co = w.shape[-1]
    ci = w.shape[-2]
    return jnp.transpose(w, (0, 4, 1, 2, 3)).reshape(3, co, 9 * ci).astype(jnp.bfloat16)


def init_params(key, in_channels, out_channels, num_groups):
    # decoder config: conv1 in->out, conv2 out->out, 1x1 skip in->out (bias=True)
    c1_in, c1_out = in_channels, out_channels
    c2_in, c2_out = out_channels, out_channels
    g1 = num_groups if c1_in >= num_groups else 1
    g2 = num_groups if c2_in >= num_groups else 1
    k1, k2, k3, k4, k5, k6, k7, k8 = jax.random.split(key, 8)
    return {
        'g1': g1, 'g2': g2,
        'gn1_w': 1.0 + 0.5 * jax.random.normal(k1, (c1_in,), jnp.float32),
        'gn1_b': 0.1 * jax.random.normal(k2, (c1_in,), jnp.float32),
        'w1': jax.random.normal(k3, (3, 3, 3, c1_in, c1_out), jnp.float32) / jnp.sqrt(27.0 * c1_in),
        'gn2_w': 1.0 + 0.5 * jax.random.normal(k4, (c2_in,), jnp.float32),
        'gn2_b': 0.1 * jax.random.normal(k5, (c2_in,), jnp.float32),
        'w2': jax.random.normal(k6, (3, 3, 3, c2_in, c2_out), jnp.float32) / jnp.sqrt(27.0 * c2_in),
        'ws': jax.random.normal(k7, (in_channels, c2_out), jnp.float32) / jnp.sqrt(float(in_channels)),
        'bs': 0.1 * jax.random.normal(k8, (c2_out,), jnp.float32),
    }


def sparse_res_block(x, params, feat_depth=0):
    # x: (N, D, H, W, C) dense voxel grid (channels-last model of the sparse tensor).
    N, D, H, W, Cin = x.shape
    HW = H * W
    assert HW % 128 == 0, "H*W must be a multiple of 128 for lane-dense slab tiling"
    L = D * HW
    Cmid = params['w1'].shape[-1]
    Cout = params['w2'].shape[-1]
    TD = _choose_td(D, HW, max(Cin, Cmid), max(Cmid, Cout))

    # layout plumbing: channels on sublanes, depth*spatial flattened on lanes
    xk = jnp.transpose(x, (0, 4, 1, 2, 3)).reshape(N, Cin, L)

    # ConvBlock 1 ('gcs'): GroupNorm -> SparseConv3d(3, bias=False) -> SiLU, with
    # GN2's statistics fused into the same kernel (no second stats pass over h1).
    ps1, pq1 = gn_stats(xk, TD, HW)
    sc1, sh1 = gn_scale_shift(ps1, pq1, params['gn1_w'], params['gn1_b'],
                              params['g1'], D * HW)
    h1, ps2, pq2 = conv_block(xk, sc1, sh1, pack_weights(params['w1']), H, W, TD)

    # ConvBlock 2 fused with the 1x1 skip conv (bias) + residual add.
    sc2, sh2 = gn_scale_shift(ps2, pq2, params['gn2_w'], params['gn2_b'],
                              params['g2'], D * HW)
    out = conv_block_skip(h1, sc2, sh2, pack_weights(params['w2']), xk,
                          params['ws'].T.astype(jnp.bfloat16),
                          params['bs'].reshape(-1, 1).astype(jnp.float32),
                          H, W, TD)
    out = out.reshape(N, Cout, D, H, W).transpose(0, 2, 3, 4, 1)
    return out, feat_depth


# ---------------------------- pure-JAX reference ---------------------------- #

def _ref_groupnorm(x, G, w, b):
    N, D, H, W, C = x.shape
    xg = x.reshape(N, D * H * W, G, C // G)
    mean = xg.mean(axis=(1, 3), keepdims=True)
    var = ((xg - mean) ** 2).mean(axis=(1, 3), keepdims=True)
    xn = ((xg - mean) / jnp.sqrt(var + EPS)).reshape(N, D, H, W, C)
    return xn * w.reshape(1, 1, 1, 1, C) + b.reshape(1, 1, 1, 1, C)


def _ref_conv3(x, w):
    return lax.conv_general_dilated(x, w, (1, 1, 1), 'SAME',
                                    dimension_numbers=('NDHWC', 'DHWIO', 'NDHWC'))


def ref_forward(x, params):
    silu = lambda t: t * jax.nn.sigmoid(t)
    h = silu(_ref_conv3(_ref_groupnorm(x, params['g1'], params['gn1_w'], params['gn1_b']), params['w1']))
    h = silu(_ref_conv3(_ref_groupnorm(h, params['g2'], params['gn2_w'], params['gn2_b']), params['w2']))
    skip = jnp.einsum('ndhwc,co->ndhwo', x, params['ws']) + params['bs'].reshape(1, 1, 1, 1, -1)
    return h + skip


# --------------------------------- main ------------------------------------ #

if __name__ == "__main__":
    N, D, H, W = 2, 8, 16, 16
    in_channels, out_channels, num_groups = 4, 8, 2

    x = jax.random.normal(jax.random.PRNGKey(0), (N, D, H, W, in_channels), jnp.float32)
    params = init_params(jax.random.PRNGKey(1), in_channels, out_channels, num_groups)

    out, feat_depth = sparse_res_block(x, params, feat_depth=0)
    out = jax.block_until_ready(out)

    ref = ref_forward(x, params)
    assert out.shape == (N, D, H, W, out_channels), out.shape
    assert feat_depth == 0
    max_err = float(jnp.max(jnp.abs(out - ref)))
    ref_scale = float(jnp.max(jnp.abs(ref)))
    # bf16 MXU operands + bf16 intermediate h1 -> relaxed (relative-to-max) tolerance.
    assert max_err < 3e-2 * max(1.0, ref_scale), (max_err, ref_scale)

    print("KERNEL_OK")
</pallas_src>

<mosaic_0001>
module attributes {stable_mosaic.version = 11 : i64} {
  func.func @_gn_stats_kernel(%arg0: i32, %arg1: i32, %arg2: memref<1x4x2048xf32, #tpu.memory_space<vmem>>, %arg3: memref<1x1x4x1xf32, #tpu.memory_space<vmem>>, %arg4: memref<1x1x4x1xf32, #tpu.memory_space<vmem>>) attributes {dimension_semantics = [#tpu.dimension_semantics<parallel>, #tpu.dimension_semantics<parallel>], iteration_bounds = array<i64: 2, 1>, scalar_prefetch = 0 : i64, scratch_operands = 0 : i64, tpu.core_type = #tpu.core_type<tc>, window_params = [{transform_indices = @transform_0, window_bounds = array<i64: 1, 4, 2048>}, {transform_indices = @transform_1, window_bounds = array<i64: 1, 1, 4, 1>}, {transform_indices = @transform_2, window_bounds = array<i64: 1, 1, 4, 1>}]} {
    %c0 = arith.constant 0 : index
    %c0_0 = arith.constant 0 : index
    %c0_1 = arith.constant 0 : index
    %0 = vector.load %arg2[%c0, %c0_0, %c0_1] : memref<1x4x2048xf32, #tpu.memory_space<vmem>>, vector<1x4x2048xf32>
    %1 = vector.shape_cast %0 : vector<1x4x2048xf32> to vector<4x2048xf32>
    %cst = arith.constant dense<0.000000e+00> : vector<4xf32>
    %2 = vector.multi_reduction <add>, %1, %cst [1] : vector<4x2048xf32> to vector<4xf32>
    %3 = vector.shape_cast %2 : vector<4xf32> to vector<4x1xf32>
    %c0_2 = arith.constant 0 : index
    %c0_3 = arith.constant 0 : index
    %c0_4 = arith.constant 0 : index
    %c0_5 = arith.constant 0 : index
    %4 = vector.load %arg3[%c0_2, %c0_3, %c0_4, %c0_5] : memref<1x1x4x1xf32, #tpu.memory_space<vmem>>, vector<1x1x4x1xf32>
    %5 = vector.shape_cast %4 : vector<1x1x4x1xf32> to vector<4x1xf32>
    %6 = vector.shape_cast %3 : vector<4x1xf32> to vector<1x1x4x1xf32>
    tpu.vector_store %arg3[%c0_2, %c0_3, %c0_4, %c0_5], %6 {strides = array<i32>} : memref<1x1x4x1xf32, #tpu.memory_space<vmem>>, vector<1x1x4x1xf32>,
    %7 = arith.mulf %1, %1 : vector<4x2048xf32>
    %cst_6 = arith.constant dense<0.000000e+00> : vector<4xf32>
    %8 = vector.multi_reduction <add>, %7, %cst_6 [1] : vector<4x2048xf32> to vector<4xf32>
    %9 = vector.shape_cast %8 : vector<4xf32> to vector<4x1xf32>
    %c0_7 = arith.constant 0 : index
    %c0_8 = arith.constant 0 : index
    %c0_9 = arith.constant 0 : index
    %c0_10 = arith.constant 0 : index
    %10 = vector.load %arg4[%c0_7, %c0_8, %c0_9, %c0_10] : memref<1x1x4x1xf32, #tpu.memory_space<vmem>>, vector<1x1x4x1xf32>
    %11 = vector.shape_cast %10 : vector<1x1x4x1xf32> to vector<4x1xf32>
    %12 = vector.shape_cast %9 : vector<4x1xf32> to vector<1x1x4x1xf32>
    tpu.vector_store %arg4[%c0_7, %c0_8, %c0_9, %c0_10], %12 {strides = array<i32>} : memref<1x1x4x1xf32, #tpu.memory_space<vmem>>, vector<1x1x4x1xf32>,
    return
  }
  func.func @transform_0(%arg0: i32, %arg1: i32) -> (i32, i32, i32) {
    %c0_i32 = arith.constant 0 : i32
    %c0_i32_0 = arith.constant 0 : i32
    return %arg0, %c0_i32, %arg1 : i32, i32, i32
  }
  func.func @transform_1(%arg0: i32, %arg1: i32) -> (i32, i32, i32, i32) {
    %c0_i32 = arith.constant 0 : i32
    %c0_i32_0 = arith.constant 0 : i32
    %c0_i32_1 = arith.constant 0 : i32
    return %arg0, %arg1, %c0_i32, %c0_i32_0 : i32, i32, i32, i32
  }
  func.func @transform_2(%arg0: i32, %arg1: i32) -> (i32, i32, i32, i32) {
    %c0_i32 = arith.constant 0 : i32
    %c0_i32_0 = arith.constant 0 : i32
    %c0_i32_1 = arith.constant 0 : i32
    return %arg0, %arg1, %c0_i32, %c0_i32_0 : i32, i32, i32, i32
  }
}

</mosaic_0001>

<llo_original>
// kernel: tpu_custom_call.1
$region0: #{tpu_custom_call.1}
  #allocation0 [shape = 'u32[]', space=smem, size = 0x4, offset = 0x4, fixed_abs, tag = 'smem constant byte address 0x4 - core index']
  #allocation1 [shape = 'u32[144,128]{1,0:T(1,128)}', space=vmem, size = 0x12000, scoped, tag = 'internal scratch']
  %s0 = inlined_call_operand.hbm [shape: f32[2,4,2048], index: 0, kind: input, shape index: {}]
  %s1 = inlined_call_operand.vmem [shape: f32[2,1,4,1], index: 1, kind: output, shape index: {0}]
  %s2 = inlined_call_operand.vmem [shape: f32[2,1,4,1], index: 2, kind: output, shape index: {1}]
  %3 = xla_tuple %s1, %s2
  %s4 = sld [smem:[#allocation0]]
  $region49: #{tpu_custom_call.1} parent=0
    _
  %s6 = ssub.s32 1, %s4
  %s7 = scalar_select 0, %s6, %s4
  $region1: #{tpu_custom_call.1} parent=0
    #allocation2 [shape = 'u8[65536]{0}', space=vmem, size = 0x10000, scoped, tag = 'input window, operand 0']
    #allocation3 [shape = 's32[2]{0}', space=sflag, size = 0x8, scoped, tag = 'scoped memory for tpu_custom_call.1']
    %8 = vsyncpa [#allocation3], 0
    %s9 = scalar_lea.sflag [#allocation3], 1
    %10 = vsyncpa %s9, 0
    loop: start=0, step=1, limit=4
    $region2: #{tpu_custom_call.1} parent=1 // loop_pre_header
      _
    $region3: #{tpu_custom_call.1} parent=1 // loop_header
      %s12 = sphi 0, %s16
      %p13 = scmp.ge.s32.totalorder %s12, 4
      %s19 = sphi 0, %s31
      %s20 = sphi 0, %s27
      %s21 = sphi 0, %s19
      %s22 = sphi 0, %s20
      %s23 = sphi 0, %s21
      %s24 = sphi 0, %s22
      %s36 = sphi 0, %s38
      %s39 = sphi 0, %s36
      %s40 = sphi 0, %s39
      %s56 = sphi 0, %s40
      %s64 = sphi 0, %s66
      %s67 = sphi 0, %s64
      %s68 = sphi 0, %s67
      %s84 = sphi 0, %s68
      %s92 = sphi 0, %s94
      %s95 = sphi 0, %s92
      %s96 = sphi 0, %s95
      %s112 = sphi 0, %s96
    $region4: #{tpu_custom_call.1} parent=1 // loop_header_branch
      %15 = sbr.rel (%p13) target = $region8
    $region5: #{tpu_custom_call.1} parent=1 // loop_body
      %s17 = ssub.s32 %s12, 1
      %s18 = ssub.s32 %s12, 2
      %s25 = sadd.s32 1, %s20
      %p26 = scmp.ge.s32.totalorder %s25, 1
      %s27 = scalar_select %p26, 0, %s25
      %s28 = sadd.s32 1, %s19
      %s29 = scalar_select %p26, %s28, %s19
      %p30 = scmp.ge.s32.totalorder %s29, 2
      %s31 = scalar_select %p30, 0, %s29
      %s32 = ssub.s32 %s19, %s31
      %s33 = ssub.s32 %s20, %s27
      %s34 = sor.u32 %s32, %s33
      %p35 = scmp.eq.s32.totalorder %s34, 0
      %s37 = sadd.s32 %s36, 1
      %s38 = scalar_select %p35, %s36, %s37
      %p41 = pneg %p35
      %p42 = scmp.eq.s32.totalorder %s12, 1
      %p43 = por %p41, %p42
      %p44 = scmp.ne.s32.totalorder %s36, %s39
      %p45 = scmp.eq.s32.totalorder %s12, 0
      %p46 = por %p44, %p45
      %p47 = scmp.ne.s32.totalorder %s36, %s39
      %p48 = scmp.eq.s32.totalorder %s17, 1
      %p49 = por %p47, %p48
      %p50 = scmp.ne.s32.totalorder %s39, %s40
      %p51 = scmp.eq.s32.totalorder %s17, 0
      %p52 = por %p50, %p51
      %p53 = scmp.ne.s32.totalorder %s39, %s40
      %p54 = scmp.eq.s32.totalorder %s18, 1
      %p55 = por %p53, %p54
      %p57 = scmp.ne.s32.totalorder %s40, %s56
      %p58 = scmp.eq.s32.totalorder %s18, 0
      %p59 = por %p57, %p58
      %s60 = ssub.s32 %s19, %s31
      %s61 = ssub.s32 %s20, %s27
      %s62 = sor.u32 %s60, %s61
      %p63 = scmp.eq.s32.totalorder %s62, 0
      %s65 = sadd.s32 %s64, 1
      %s66 = scalar_select %p63, %s64, %s65
      %p69 = pneg %p63
      %p70 = scmp.eq.s32.totalorder %s12, 1
      %p71 = por %p69, %p70
      %p72 = scmp.ne.s32.totalorder %s64, %s67
      %p73 = scmp.eq.s32.totalorder %s12, 0
      %p74 = por %p72, %p73
      %p75 = scmp.ne.s32.totalorder %s64, %s67
      %p76 = scmp.eq.s32.totalorder %s17, 1
      %p77 = por %p75, %p76
      %p78 = scmp.ne.s32.totalorder %s67, %s68
      %p79 = scmp.eq.s32.totalorder %s17, 0
      %p80 = por %p78, %p79
      %p81 = scmp.ne.s32.totalorder %s67, %s68
      %p82 = scmp.eq.s32.totalorder %s18, 1
      %p83 = por %p81, %p82
      %p85 = scmp.ne.s32.totalorder %s68, %s84
      %p86 = scmp.eq.s32.totalorder %s18, 0
      %p87 = por %p85, %p86
      %s88 = ssub.s32 %s19, %s31
      %s89 = ssub.s32 %s20, %s27
      %s90 = sor.u32 %s88, %s89
      %p91 = scmp.eq.s32.totalorder %s90, 0
      %s93 = sadd.s32 %s92, 1
      %s94 = scalar_select %p91, %s92, %s93
      %p97 = pneg %p91
      %p98 = scmp.eq.s32.totalorder %s12, 1
      %p99 = por %p97, %p98
      %p100 = scmp.ne.s32.totalorder %s92, %s95
      %p101 = scmp.eq.s32.totalorder %s12, 0
      %p102 = por %p100, %p101
      %p103 = scmp.ne.s32.totalorder %s92, %s95
      %p104 = scmp.eq.s32.totalorder %s17, 1
      %p105 = por %p103, %p104
      %p106 = scmp.ne.s32.totalorder %s95, %s96
      %p107 = scmp.eq.s32.totalorder %s17, 0
      %p108 = por %p106, %p107
      %p109 = scmp.ne.s32.totalorder %s95, %s96
      %p110 = scmp.eq.s32.totalorder %s18, 1
      %p111 = por %p109, %p110
      %p113 = scmp.ne.s32.totalorder %s96, %s112
      %p114 = scmp.eq.s32.totalorder %s18, 0
      %p115 = por %p113, %p114
      %p116 = scmp.le.s32.totalorder 1, %s12
      %p117 = scmp.lt.s32.totalorder %s12, 3
      %p118 = pnand %p116, %p117
      %p119 = pneg %p118
      // Predicated region
      $region9: #{tpu_custom_call.1} parent=5 // pred_check
        _
      $region10: #{tpu_custom_call.1} parent=5 // pred_check_branch
        %121 = sbr.rel (%p118) target = $region12
      $region11: #{tpu_custom_call.1} parent=5 // pred_region
        %s122 = ssub.s32 %s12, 1
      $region12: #{tpu_custom_call.1} parent=5 // pred_fallthru
        _
      %p123 = scmp.lt.s32.totalorder %s12, 2
      // Predicated region
      $region13: #{tpu_custom_call.1} parent=5 // pred_check
        %p124 = pneg %p123
      $region14: #{tpu_custom_call.1} parent=5 // pred_check_branch
        %126 = sbr.rel (%p124) target = $region16
      $region15: #{tpu_custom_call.1} parent=5 // pred_region
        // Predicated region
        $region17: #{tpu_custom_call.1} parent=15 // pred_check
          %p127 = pneg %p46
        $region18: #{tpu_custom_call.1} parent=15 // pred_check_branch
          %129 = sbr.rel (%p127) target = $region20
        $region19: #{tpu_custom_call.1} parent=15 // pred_region
          %s130 = sand.u32 %s36, 1
          %s131 = scalar_lea.sflag [#allocation3], %s130
          %s132 = sand.u32 %s36, 1
          %s133 = smul.addr %s132, 64
          %s134 = scalar_lea.vmem [#allocation2], %s133
          %s135 = smul.u32 16, %s20
          %s137 = ssub.s32 1024, 1024
          %138 = vsyncadd %s131, %s137
          %s139 = smul.addr %s19, 16
          %s140 = sadd.s32 %s135, %s139
          %s141 = smul.addr %s140, 64
          %s142 = scalar_lea.hbm %s0, %s141
          %s144 = sshll.u32 %s134, 4
          %s145 = int_to_ptr.vmem [resolvable:$true] %s144
          %147 = dma.hbm_to_vmem [thread:$0]  %s142, 1024, %s145, %s131
        $region20: #{tpu_custom_call.1} parent=15 // pred_fallthru
          _
      $region16: #{tpu_custom_call.1} parent=5 // pred_fallthru
        _
      %p148 = scmp.le.s32.totalorder 1, %s12
      %p149 = scmp.lt.s32.totalorder %s12, 3
      %p150 = pnand %p148, %p149
      %p151 = pneg %p150
      // Predicated region
      $region21: #{tpu_custom_call.1} parent=5 // pred_check
        _
      $region22: #{tpu_custom_call.1} parent=5 // pred_check_branch
        %153 = sbr.rel (%p150) target = $region24
      $region23: #{tpu_custom_call.1} parent=5 // pred_region
        %s154 = ssub.s32 %s12, 1
        %s155 = sand.u32 %s39, 1
        %s156 = scalar_lea.sflag [#allocation3], %s155
        %s157 = sand.u32 %s39, 1
        %s158 = smul.addr %s157, 64
        %s159 = scalar_lea.vmem [#allocation2], %s158
        // Predicated region
        $region25: #{tpu_custom_call.1} parent=23 // pred_check
          %p160 = pneg %p52
        $region26: #{tpu_custom_call.1} parent=23 // pred_check_branch
          %162 = sbr.rel (%p160) target = $region28
        $region27: #{tpu_custom_call.1} parent=23 // pred_region
          %163 = dma.done %s156, 1024
        $region28: #{tpu_custom_call.1} parent=23 // pred_fallthru
          _
        %s164 = sand.u32 %s39, 1
        %s165 = scalar_lea.sflag [#allocation3], %s164
        %s166 = sand.u32 %s39, 1
        %s167 = smul.addr %s166, 64
        %s168 = scalar_lea.vmem [#allocation2], %s167
        %p169 = pneg %p52
        %p170 = pneg %p49
        %p171 = pneg %p80
        %p172 = pneg %p77
        %p173 = scmp.lt.s32.totalorder %s21, 1
        %s174 = scalar_select %p173, %s21, 1
        %p175 = scmp.lt.s32.totalorder %s22, 0
        %s176 = scalar_select %p175, %s22, 0
        %s177 = sadd.s32 %s176, %s174
        %s178 = smul.addr %s177, 4
        %s179 = scalar_lea.vmem %s1, %s178
        %p180 = pneg %p108
        %p181 = pneg %p105
        %p182 = scmp.lt.s32.totalorder %s21, 1
        %s183 = scalar_select %p182, %s21, 1
        %p184 = scmp.lt.s32.totalorder %s22, 0
        %s185 = scalar_select %p184, %s22, 0
        %s186 = sadd.s32 %s185, %s183
        %s187 = smul.addr %s186, 4
        %s188 = scalar_lea.vmem %s2, %s187
        %s189 = smul.u32 16, %s22
        %p190 = scmp.lt.s32.totalorder %s21, 1
        %s191 = scalar_select %p190, %s21, 1
        %p192 = scmp.lt.s32.totalorder %s22, 0
        %s193 = scalar_select %p192, %s22, 0
        %s194 = sadd.s32 %s193, %s191
        %s195 = smul.addr %s194, 4
        %s196 = scalar_lea.vmem %s1, %s195
        %p197 = scmp.lt.s32.totalorder %s21, 1
        %s198 = scalar_select %p197, %s21, 1
        %p199 = scmp.lt.s32.totalorder %s22, 0
        %s200 = scalar_select %p199, %s22, 0
        %s201 = sadd.s32 %s200, %s198
        %s202 = smul.addr %s201, 4
        %s203 = scalar_lea.vmem %s2, %s202
        %v204 = vld [vmem:[%s159] sm:$0xff]
        %v205 = vld [vmem:[%s159 + $0x8] sm:$0xff]
        %v206 = vld [vmem:[%s159 + $0x10] sm:$0xff]
        %v207 = vld [vmem:[%s159 + $0x18] sm:$0xff]
        %v208 = vld [vmem:[%s159 + $0x20] sm:$0xff]
        %v209 = vld [vmem:[%s159 + $0x28] sm:$0xff]
        %v210 = vld [vmem:[%s159 + $0x30] sm:$0xff]
        %v211 = vld [vmem:[%s159 + $0x38] sm:$0xff]
        %v220 = vcombine.high %v204, %v204
        %v221 = vcombine.high %v205, %v205
        %v222 = vcombine.high %v206, %v206
        %v223 = vcombine.high %v207, %v207
        %v224 = vcombine.high %v208, %v208
        %v225 = vcombine.high %v209, %v209
        %v226 = vcombine.high %v210, %v210
        %v227 = vcombine.high %v211, %v211
        %vm236 = vcmask 1043456
        %v237 = vsel %vm236, %v204, 0.0
        %v238 = vsel %vm236, %v220, 0.0
        %v239 = vadd.f32 %v237, %v238
        %v240 = vsel %vm236, %v205, 0.0
        %v241 = vadd.f32 %v239, %v240
        %v242 = vsel %vm236, %v221, 0.0
        %v243 = vadd.f32 %v241, %v242
        %v244 = vsel %vm236, %v206, 0.0
        %v245 = vadd.f32 %v243, %v244
        %v246 = vsel %vm236, %v222, 0.0
        %v247 = vadd.f32 %v245, %v246
        %v248 = vsel %vm236, %v207, 0.0
        %v249 = vadd.f32 %v247, %v248
        %v250 = vsel %vm236, %v223, 0.0
        %v251 = vadd.f32 %v249, %v250
        %v252 = vsel %vm236, %v208, 0.0
        %v253 = vadd.f32 %v251, %v252
        %v254 = vsel %vm236, %v224, 0.0
        %v255 = vadd.f32 %v253, %v254
        %v256 = vsel %vm236, %v209, 0.0
        %v257 = vadd.f32 %v255, %v256
        %v258 = vsel %vm236, %v225, 0.0
        %v259 = vadd.f32 %v257, %v258
        %v260 = vsel %vm236, %v210, 0.0
        %v261 = vadd.f32 %v259, %v260
        %v262 = vsel %vm236, %v226, 0.0
        %v263 = vadd.f32 %v261, %v262
        %v264 = vsel %vm236, %v211, 0.0
        %v265 = vadd.f32 %v263, %v264
        %v266 = vsel %vm236, %v227, 0.0
        %v267 = vadd.f32 %v265, %v266
        %268 = vadd.xlane.f32.xlu0 %v267
        %v269 = vpop.xlane.xlu0 %268
        %vm270 = vcmask 3072
        %271 = vst.msk [vmem:[%s196] sm:$0xf] %vm270, %v269
        %v272 = vmul.f32 %v204, %v204
        %v273 = vmul.f32 %v205, %v205
        %v274 = vmul.f32 %v206, %v206
        %v275 = vmul.f32 %v207, %v207
        %v276 = vmul.f32 %v208, %v208
        %v277 = vmul.f32 %v209, %v209
        %v278 = vmul.f32 %v210, %v210
        %v279 = vmul.f32 %v211, %v211
        %v288 = vcombine.high %v272, %v272
        %v289 = vcombine.high %v273, %v273
        %v290 = vcombine.high %v274, %v274
        %v291 = vcombine.high %v275, %v275
        %v292 = vcombine.high %v276, %v276
        %v293 = vcombine.high %v277, %v277
        %v294 = vcombine.high %v278, %v278
        %v295 = vcombine.high %v279, %v279
        %v304 = vsel %vm236, %v272, 0.0
        %v305 = vsel %vm236, %v288, 0.0
        %v306 = vadd.f32 %v304, %v305
        %v307 = vsel %vm236, %v273, 0.0
        %v308 = vadd.f32 %v306, %v307
        %v309 = vsel %vm236, %v289, 0.0
        %v310 = vadd.f32 %v308, %v309
        %v311 = vsel %vm236, %v274, 0.0
        %v312 = vadd.f32 %v310, %v311
        %v313 = vsel %vm236, %v290, 0.0
        %v314 = vadd.f32 %v312, %v313
        %v315 = vsel %vm236, %v275, 0.0
        %v316 = vadd.f32 %v314, %v315
        %v317 = vsel %vm236, %v291, 0.0
        %v318 = vadd.f32 %v316, %v317
        %v319 = vsel %vm236, %v276, 0.0
        %v320 = vadd.f32 %v318, %v319
        %v321 = vsel %vm236, %v292, 0.0
        %v322 = vadd.f32 %v320, %v321
        %v323 = vsel %vm236, %v277, 0.0
        %v324 = vadd.f32 %v322, %v323
        %v325 = vsel %vm236, %v293, 0.0
        %v326 = vadd.f32 %v324, %v325
        %v327 = vsel %vm236, %v278, 0.0
        %v328 = vadd.f32 %v326, %v327
        %v329 = vsel %vm236, %v294, 0.0
        %v330 = vadd.f32 %v328, %v329
        %v331 = vsel %vm236, %v279, 0.0
        %v332 = vadd.f32 %v330, %v331
        %v333 = vsel %vm236, %v295, 0.0
        %v334 = vadd.f32 %v332, %v333
        %335 = vadd.xlane.f32.xlu0 %v334
        %v336 = vpop.xlane.xlu0 %335
        %337 = vst.msk [vmem:[%s203] sm:$0xf] %vm270, %v336
        %p338 = scmp.lt.s32.totalorder %s21, 1
        %s339 = scalar_select %p338, %s21, 1
        %p340 = scmp.lt.s32.totalorder %s22, 0
        %s341 = scalar_select %p340, %s22, 0
        %s342 = sadd.s32 %s341, %s339
        %s343 = smul.addr %s342, 4
        %s344 = scalar_lea.vmem %s1, %s343
        %p345 = scmp.lt.s32.totalorder %s21, 1
        %s346 = scalar_select %p345, %s21, 1
        %p347 = scmp.lt.s32.totalorder %s22, 0
        %s348 = scalar_select %p347, %s22, 0
        %s349 = sadd.s32 %s348, %s346
        %s350 = smul.addr %s349, 4
        %s351 = scalar_lea.vmem %s2, %s350
        // Predicated region
        $region29: #{tpu_custom_call.1} parent=23 // pred_check
          %p352 = pneg %p77
        $region30: #{tpu_custom_call.1} parent=23 // pred_check_branch
          %354 = sbr.rel (%p352) target = $region32
        $region31: #{tpu_custom_call.1} parent=23 // pred_region
          _
        $region32: #{tpu_custom_call.1} parent=23 // pred_fallthru
          _
        // Predicated region
        $region33: #{tpu_custom_call.1} parent=23 // pred_check
          %p355 = pneg %p105
        $region34: #{tpu_custom_call.1} parent=23 // pred_check_branch
          %357 = sbr.rel (%p355) target = $region36
        $region35: #{tpu_custom_call.1} parent=23 // pred_region
          _
        $region36: #{tpu_custom_call.1} parent=23 // pred_fallthru
          _
      $region24: #{tpu_custom_call.1} parent=5 // pred_fallthru
        _
      %p358 = scmp.le.s32.totalorder 2, %s12
      // Predicated region
      $region37: #{tpu_custom_call.1} parent=5 // pred_check
        %p359 = pneg %p358
      $region38: #{tpu_custom_call.1} parent=5 // pred_check_branch
        %361 = sbr.rel (%p359) target = $region40
      $region39: #{tpu_custom_call.1} parent=5 // pred_region
        %s362 = ssub.s32 %s12, 2
        // Predicated region
        $region41: #{tpu_custom_call.1} parent=39 // pred_check
          %p363 = pneg %p83
        $region42: #{tpu_custom_call.1} parent=39 // pred_check_branch
          %365 = sbr.rel (%p363) target = $region44
        $region43: #{tpu_custom_call.1} parent=39 // pred_region
          %p366 = scmp.lt.s32.totalorder %s23, 1
          %s367 = scalar_select %p366, %s23, 1
          %p368 = scmp.lt.s32.totalorder %s24, 0
          %s369 = scalar_select %p368, %s24, 0
          %s370 = sadd.s32 %s369, %s367
          %s371 = smul.addr %s370, 4
          %s372 = scalar_lea.vmem %s1, %s371
        $region44: #{tpu_custom_call.1} parent=39 // pred_fallthru
          _
        // Predicated region
        $region45: #{tpu_custom_call.1} parent=39 // pred_check
          %p373 = pneg %p111
        $region46: #{tpu_custom_call.1} parent=39 // pred_check_branch
          %375 = sbr.rel (%p373) target = $region48
        $region47: #{tpu_custom_call.1} parent=39 // pred_region
          %p376 = scmp.lt.s32.totalorder %s23, 1
          %s377 = scalar_select %p376, %s23, 1
          %p378 = scmp.lt.s32.totalorder %s24, 0
          %s379 = scalar_select %p378, %s24, 0
          %s380 = sadd.s32 %s379, %s377
          %s381 = smul.addr %s380, 4
          %s382 = scalar_lea.vmem %s2, %s381
        $region48: #{tpu_custom_call.1} parent=39 // pred_fallthru
          _
      $region40: #{tpu_custom_call.1} parent=5 // pred_fallthru
        _
    $region6: #{tpu_custom_call.1} parent=1 // loop_footer
      %s16 = sadd.s32 1, %s12
    $region7: #{tpu_custom_call.1} parent=1 // loop_footer_branch
      %11 = sbr.rel target = $region3
    $region8: #{tpu_custom_call.1} parent=1 // loop_exit
      _
    %383 = vsyncpa [#allocation3], 1
    %s384 = scalar_lea.sflag [#allocation3], 1
    %385 = vsyncpa %s384, 1

</llo_original>
